<compile_context>
chip_gen: v6e
topology: v6e:2x2x1
jax: 0.10.0
libtpu: 0.0.40
codegen_flags: <defaults>
</compile_context>

<pallas_src>
import jax
import jax.numpy as jnp
from jax.experimental import pallas as pl
from jax.experimental.pallas import tpu as pltpu


def mlp_kernel(x_ref,
               w1_ref, b1_ref,
               w2_ref, b2_ref,
               w3_ref, b3_ref,
               w4_ref, b4_ref,
               w5_ref, b5_ref,
               o_ref):
    """Whole 5-layer MLP fused into one kernel per (folded) batch tile.

    All feature dims are tiny (<= fold*32), so every weight/bias lives as a full
    block in VMEM for the entire grid; only the batch dimension is tiled.
    Shapes are the block-diagonal (batch-folded) ones built in the wrapper.
    """
    h = x_ref[...]  # f32 (tile_rows, fold*D)

    # Linear + ReLU x4   (Dropout = identity in eval)
    h = jnp.maximum(
        jnp.dot(h, w1_ref[...], preferred_element_type=jnp.float32) + b1_ref[...], 0.0)
    h = jnp.maximum(
        jnp.dot(h, w2_ref[...], preferred_element_type=jnp.float32) + b2_ref[...], 0.0)
    h = jnp.maximum(
        jnp.dot(h, w3_ref[...], preferred_element_type=jnp.float32) + b3_ref[...], 0.0)
    h = jnp.maximum(
        jnp.dot(h, w4_ref[...], preferred_element_type=jnp.float32) + b4_ref[...], 0.0)

    # Linear(8,1) (folded: 32 -> fold) + exact Sigmoid (exp on EUP; one cheap divide).
    z = jnp.dot(h, w5_ref[...], preferred_element_type=jnp.float32) + b5_ref[...]
    o_ref[...] = (1.0 / (1.0 + jnp.exp(-z))).astype(o_ref.dtype)


def dnn_model1_forward(x, params, *, fold=4, tile_rows=1024):
    """x: (B, D) float32. params: list of (W, b), W: (in, out), b: (1, out).

    fold:      batch rows folded into the lane axis via block-diagonal weights.
               4 is portable (v5e MXU is 128 wide); use 8 on v6e/v7x.
    tile_rows: folded rows per grid step (multiple of 8). Default 1024
               (= fold*1024 original batch rows); sweep 512..2048 in prod.
    """
    B, D = x.shape
    assert tile_rows % 8 == 0, "tile_rows must be a multiple of 8 (sublane alignment)"

    (w1, b1), (w2, b2), (w3, b3), (w4, b4), (w5, b5) = params

    # --- Block-diagonal batch folding (wrapper-side, numerically exact in f32) ---
    eye = jnp.eye(fold, dtype=jnp.float32)

    def fold_w(w):  # (in, out) -> (fold*in, fold*out) block-diagonal
        return jnp.kron(eye, w)

    def fold_b(b):  # (1, out) -> (1, fold*out)
        return jnp.tile(b, (1, fold))

    w1f, b1f = fold_w(w1), fold_b(b1)
    w2f, b2f = fold_w(w2), fold_b(b2)
    w3f, b3f = fold_w(w3), fold_b(b3)
    w4f, b4f = fold_w(w4), fold_b(b4)
    w5f, b5f = fold_w(w5), fold_b(b5)

    # --- Grid / padding over the folded batch axis ---
    bf_needed = pl.cdiv(B, fold)                                # folded rows required
    tile_rows_eff = min(tile_rows, ((bf_needed + 7) // 8) * 8)  # don't over-tile tiny B
    num_tiles = pl.cdiv(bf_needed, tile_rows_eff)
    bf_pad = num_tiles * tile_rows_eff
    b_pad = bf_pad * fold
    if b_pad != B:
        x = jnp.pad(x, ((0, b_pad - B), (0, 0)))
    xf = x.reshape(bf_pad, fold * D)

    def const_spec(arr):
        # Grid-invariant parameter: constant block index => Pallas keeps the block
        # resident in VMEM and skips re-DMA on every grid step after the first.
        return pl.BlockSpec(arr.shape, lambda i: (0, 0))

    out_folded = pl.pallas_call(
        mlp_kernel,
        out_shape=jax.ShapeDtypeStruct((bf_pad, fold), jnp.float32),
        grid_spec=pltpu.PrefetchScalarGridSpec(
            num_scalar_prefetch=0,
            grid=(num_tiles,),
            in_specs=[
                pl.BlockSpec((tile_rows_eff, fold * D), lambda i: (i, 0)),  # x tile
                const_spec(w1f), const_spec(b1f),
                const_spec(w2f), const_spec(b2f),
                const_spec(w3f), const_spec(b3f),
                const_spec(w4f), const_spec(b4f),
                const_spec(w5f), const_spec(b5f),
            ],
            out_specs=pl.BlockSpec((tile_rows_eff, fold), lambda i: (i, 0)),
        ),
        compiler_params=pltpu.CompilerParams(
            # Batch tiles are independent -> shard the grid across TensorCores
            # (v7x has 2 TCs; keep num_tiles >= 2 there for full utilization).
            dimension_semantics=("parallel",)),
    )(xf, w1f, b1f, w2f, b2f, w3f, b3f, w4f, b4f, w5f, b5f)

    out = out_folded.reshape(b_pad, 1)
    if b_pad != B:
        out = out[:B]
    return out


def init_params(key, input_dim):
    """Deterministic init mimicking PyTorch nn.Linear default:
    U(-1/sqrt(fan_in), 1/sqrt(fan_in)) for both W and b.
    Weights stored as (in_features, out_features)."""
    dims = [(input_dim, 16), (16, 32), (32, 16), (16, 8), (8, 1)]
    params = []
    for (fan_in, fan_out) in dims:
        key, kw, kb = jax.random.split(key, 3)
        bound = 1.0 / jnp.sqrt(fan_in)
        w = jax.random.uniform(kw, (fan_in, fan_out), jnp.float32, -bound, bound)
        b = jax.random.uniform(kb, (1, fan_out), jnp.float32, -bound, bound)
        params.append((w, b))
    return params


def reference_forward(x, params):
    h = x
    for i, (w, b) in enumerate(params):
        h = h @ w + b
        if i < len(params) - 1:
            h = jnp.maximum(h, 0.0)
    return jax.nn.sigmoid(h)


if __name__ == "__main__":
    key = jax.random.PRNGKey(0)
    k_x, k_p = jax.random.split(key)

    # Small, deterministic example. batch=200 is deliberately NOT a multiple of
    # fold*tile_rows so the pad/slice path is exercised; tile_rows=32 forces a
    # multi-tile grid at this tiny size (production default is tile_rows=1024).
    batch, input_dim = 200, 32
    x = jax.random.normal(k_x, (batch, input_dim), jnp.float32)
    params = init_params(k_p, input_dim)

    out = dnn_model1_forward(x, params, fold=4, tile_rows=32)
    out = jax.block_until_ready(out)

    ref = reference_forward(x, params)
    assert out.shape == (batch, 1)
    assert jnp.allclose(out, ref, atol=1e-3, rtol=1e-3), "mismatch vs reference"

    print("KERNEL_OK")
</pallas_src>

<mosaic_0001>
module attributes {stable_mosaic.version = 11 : i64} {
  func.func @mlp_kernel(%arg0: i32, %arg1: memref<32x128xf32, #tpu.memory_space<vmem>>, %arg2: memref<128x64xf32, #tpu.memory_space<vmem>>, %arg3: memref<1x64xf32, #tpu.memory_space<vmem>>, %arg4: memref<64x128xf32, #tpu.memory_space<vmem>>, %arg5: memref<1x128xf32, #tpu.memory_space<vmem>>, %arg6: memref<128x64xf32, #tpu.memory_space<vmem>>, %arg7: memref<1x64xf32, #tpu.memory_space<vmem>>, %arg8: memref<64x32xf32, #tpu.memory_space<vmem>>, %arg9: memref<1x32xf32, #tpu.memory_space<vmem>>, %arg10: memref<32x4xf32, #tpu.memory_space<vmem>>, %arg11: memref<1x4xf32, #tpu.memory_space<vmem>>, %arg12: memref<32x4xf32, #tpu.memory_space<vmem>>) attributes {dimension_semantics = [#tpu.dimension_semantics<parallel>], iteration_bounds = array<i64: 2>, scalar_prefetch = 0 : i64, scratch_operands = 0 : i64, tpu.core_type = #tpu.core_type<tc>, window_params = [{transform_indices = @transform_0, window_bounds = array<i64: 32, 128>}, {pipeline_mode = #tpu.pipeline_mode<synchronous>, transform_indices = @transform_1, window_bounds = array<i64: 128, 64>}, {pipeline_mode = #tpu.pipeline_mode<synchronous>, transform_indices = @transform_2, window_bounds = array<i64: 1, 64>}, {pipeline_mode = #tpu.pipeline_mode<synchronous>, transform_indices = @transform_3, window_bounds = array<i64: 64, 128>}, {pipeline_mode = #tpu.pipeline_mode<synchronous>, transform_indices = @transform_4, window_bounds = array<i64: 1, 128>}, {pipeline_mode = #tpu.pipeline_mode<synchronous>, transform_indices = @transform_5, window_bounds = array<i64: 128, 64>}, {pipeline_mode = #tpu.pipeline_mode<synchronous>, transform_indices = @transform_6, window_bounds = array<i64: 1, 64>}, {pipeline_mode = #tpu.pipeline_mode<synchronous>, transform_indices = @transform_7, window_bounds = array<i64: 64, 32>}, {pipeline_mode = #tpu.pipeline_mode<synchronous>, transform_indices = @transform_8, window_bounds = array<i64: 1, 32>}, {pipeline_mode = #tpu.pipeline_mode<synchronous>, transform_indices = @transform_9, window_bounds = array<i64: 32, 4>}, {pipeline_mode = #tpu.pipeline_mode<synchronous>, transform_indices = @transform_10, window_bounds = array<i64: 1, 4>}, {transform_indices = @transform_11, window_bounds = array<i64: 32, 4>}]} {
    %c0 = arith.constant 0 : index
    %c0_0 = arith.constant 0 : index
    %0 = vector.load %arg1[%c0, %c0_0] : memref<32x128xf32, #tpu.memory_space<vmem>>, vector<32x128xf32>
    %c0_1 = arith.constant 0 : index
    %c0_2 = arith.constant 0 : index
    %1 = vector.load %arg2[%c0_1, %c0_2] : memref<128x64xf32, #tpu.memory_space<vmem>>, vector<128x64xf32>
    %cst = arith.constant dense<0.000000e+00> : vector<32x64xf32>
    %2 = tpu.matmul %0, %1, %cst {dimension_numbers = #tpu.dot_dimension_numbers<[1], [0], [0], [1], [0, 0, 1, 1], [], []>} : vector<32x128xf32>, vector<128x64xf32>, vector<32x64xf32> -> vector<32x64xf32>
    %c0_3 = arith.constant 0 : index
    %c0_4 = arith.constant 0 : index
    %3 = vector.load %arg3[%c0_3, %c0_4] : memref<1x64xf32, #tpu.memory_space<vmem>>, vector<1x64xf32>
    %4 = vector.broadcast %3 : vector<1x64xf32> to vector<32x64xf32>
    %5 = arith.addf %2, %4 : vector<32x64xf32>
    %cst_5 = arith.constant 0.000000e+00 : f32
    %6 = vector.broadcast %cst_5 : f32 to vector<32x64xf32>
    %7 = arith.maximumf %5, %6 : vector<32x64xf32>
    %c0_6 = arith.constant 0 : index
    %c0_7 = arith.constant 0 : index
    %8 = vector.load %arg4[%c0_6, %c0_7] : memref<64x128xf32, #tpu.memory_space<vmem>>, vector<64x128xf32>
    %cst_8 = arith.constant dense<0.000000e+00> : vector<32x128xf32>
    %9 = tpu.matmul %7, %8, %cst_8 {dimension_numbers = #tpu.dot_dimension_numbers<[1], [0], [0], [1], [0, 0, 1, 1], [], []>} : vector<32x64xf32>, vector<64x128xf32>, vector<32x128xf32> -> vector<32x128xf32>
    %c0_9 = arith.constant 0 : index
    %c0_10 = arith.constant 0 : index
    %10 = vector.load %arg5[%c0_9, %c0_10] : memref<1x128xf32, #tpu.memory_space<vmem>>, vector<1x128xf32>
    %11 = vector.broadcast %10 : vector<1x128xf32> to vector<32x128xf32>
    %12 = arith.addf %9, %11 : vector<32x128xf32>
    %cst_11 = arith.constant 0.000000e+00 : f32
    %13 = vector.broadcast %cst_11 : f32 to vector<32x128xf32>
    %14 = arith.maximumf %12, %13 : vector<32x128xf32>
    %c0_12 = arith.constant 0 : index
    %c0_13 = arith.constant 0 : index
    %15 = vector.load %arg6[%c0_12, %c0_13] : memref<128x64xf32, #tpu.memory_space<vmem>>, vector<128x64xf32>
    %cst_14 = arith.constant dense<0.000000e+00> : vector<32x64xf32>
    %16 = tpu.matmul %14, %15, %cst_14 {dimension_numbers = #tpu.dot_dimension_numbers<[1], [0], [0], [1], [0, 0, 1, 1], [], []>} : vector<32x128xf32>, vector<128x64xf32>, vector<32x64xf32> -> vector<32x64xf32>
    %c0_15 = arith.constant 0 : index
    %c0_16 = arith.constant 0 : index
    %17 = vector.load %arg7[%c0_15, %c0_16] : memref<1x64xf32, #tpu.memory_space<vmem>>, vector<1x64xf32>
    %18 = vector.broadcast %17 : vector<1x64xf32> to vector<32x64xf32>
    %19 = arith.addf %16, %18 : vector<32x64xf32>
    %cst_17 = arith.constant 0.000000e+00 : f32
    %20 = vector.broadcast %cst_17 : f32 to vector<32x64xf32>
    %21 = arith.maximumf %19, %20 : vector<32x64xf32>
    %c0_18 = arith.constant 0 : index
    %c0_19 = arith.constant 0 : index
    %22 = vector.load %arg8[%c0_18, %c0_19] : memref<64x32xf32, #tpu.memory_space<vmem>>, vector<64x32xf32>
    %cst_20 = arith.constant dense<0.000000e+00> : vector<32x32xf32>
    %23 = tpu.matmul %21, %22, %cst_20 {dimension_numbers = #tpu.dot_dimension_numbers<[1], [0], [0], [1], [0, 0, 1, 1], [], []>} : vector<32x64xf32>, vector<64x32xf32>, vector<32x32xf32> -> vector<32x32xf32>
    %c0_21 = arith.constant 0 : index
    %c0_22 = arith.constant 0 : index
    %24 = vector.load %arg9[%c0_21, %c0_22] : memref<1x32xf32, #tpu.memory_space<vmem>>, vector<1x32xf32>
    %25 = vector.broadcast %24 : vector<1x32xf32> to vector<32x32xf32>
    %26 = arith.addf %23, %25 : vector<32x32xf32>
    %cst_23 = arith.constant 0.000000e+00 : f32
    %27 = vector.broadcast %cst_23 : f32 to vector<32x32xf32>
    %28 = arith.maximumf %26, %27 : vector<32x32xf32>
    %c0_24 = arith.constant 0 : index
    %c0_25 = arith.constant 0 : index
    %29 = vector.load %arg10[%c0_24, %c0_25] : memref<32x4xf32, #tpu.memory_space<vmem>>, vector<32x4xf32>
    %cst_26 = arith.constant dense<0.000000e+00> : vector<32x4xf32>
    %30 = tpu.matmul %28, %29, %cst_26 {dimension_numbers = #tpu.dot_dimension_numbers<[1], [0], [0], [1], [0, 0, 1, 1], [], []>} : vector<32x32xf32>, vector<32x4xf32>, vector<32x4xf32> -> vector<32x4xf32>
    %c0_27 = arith.constant 0 : index
    %c0_28 = arith.constant 0 : index
    %31 = vector.load %arg11[%c0_27, %c0_28] : memref<1x4xf32, #tpu.memory_space<vmem>>, vector<1x4xf32>
    %32 = vector.broadcast %31 : vector<1x4xf32> to vector<32x4xf32>
    %33 = arith.addf %30, %32 : vector<32x4xf32>
    %cst_29 = arith.constant 0.000000e+00 : f32
    %34 = vector.broadcast %cst_29 : f32 to vector<32x4xf32>
    %35 = arith.subf %34, %33 : vector<32x4xf32>
    %36 = math.exp %35 : vector<32x4xf32>
    %cst_30 = arith.constant 1.000000e+00 : f32
    %37 = vector.broadcast %cst_30 : f32 to vector<32x4xf32>
    %38 = arith.addf %37, %36 : vector<32x4xf32>
    %cst_31 = arith.constant 1.000000e+00 : f32
    %39 = vector.broadcast %cst_31 : f32 to vector<32x4xf32>
    %40 = arith.divf %39, %38 : vector<32x4xf32>
    %c0_32 = arith.constant 0 : index
    %c0_33 = arith.constant 0 : index
    %41 = vector.load %arg12[%c0_32, %c0_33] : memref<32x4xf32, #tpu.memory_space<vmem>>, vector<32x4xf32>
    tpu.vector_store %arg12[%c0_32, %c0_33], %40 {strides = array<i32>} : memref<32x4xf32, #tpu.memory_space<vmem>>, vector<32x4xf32>,
    return
  }
  func.func @transform_0(%arg0: i32) -> (i32, i32) {
    %c0_i32 = arith.constant 0 : i32
    %c0_i32_0 = arith.constant 0 : i32
    return %arg0, %c0_i32 : i32, i32
  }
  func.func @transform_1(%arg0: i32) -> (i32, i32) {
    %c0_i32 = arith.constant 0 : i32
    %c0_i32_0 = arith.constant 0 : i32
    %c0_i32_1 = arith.constant 0 : i32
    return %c0_i32, %c0_i32_0 : i32, i32
  }
  func.func @transform_2(%arg0: i32) -> (i32, i32) {
    %c0_i32 = arith.constant 0 : i32
    %c0_i32_0 = arith.constant 0 : i32
    %c0_i32_1 = arith.constant 0 : i32
    return %c0_i32, %c0_i32_0 : i32, i32
  }
  func.func @transform_3(%arg0: i32) -> (i32, i32) {
    %c0_i32 = arith.constant 0 : i32
    %c0_i32_0 = arith.constant 0 : i32
    %c0_i32_1 = arith.constant 0 : i32
    return %c0_i32, %c0_i32_0 : i32, i32
  }
  func.func @transform_4(%arg0: i32) -> (i32, i32) {
    %c0_i32 = arith.constant 0 : i32
    %c0_i32_0 = arith.constant 0 : i32
    %c0_i32_1 = arith.constant 0 : i32
    return %c0_i32, %c0_i32_0 : i32, i32
  }
  func.func @transform_5(%arg0: i32) -> (i32, i32) {
    %c0_i32 = arith.constant 0 : i32
    %c0_i32_0 = arith.constant 0 : i32
    %c0_i32_1 = arith.constant 0 : i32
    return %c0_i32, %c0_i32_0 : i32, i32
  }
  func.func @transform_6(%arg0: i32) -> (i32, i32) {
    %c0_i32 = arith.constant 0 : i32
    %c0_i32_0 = arith.constant 0 : i32
    %c0_i32_1 = arith.constant 0 : i32
    return %c0_i32, %c0_i32_0 : i32, i32
  }
  func.func @transform_7(%arg0: i32) -> (i32, i32) {
    %c0_i32 = arith.constant 0 : i32
    %c0_i32_0 = arith.constant 0 : i32
    %c0_i32_1 = arith.constant 0 : i32
    return %c0_i32, %c0_i32_0 : i32, i32
  }
  func.func @transform_8(%arg0: i32) -> (i32, i32) {
    %c0_i32 = arith.constant 0 : i32
    %c0_i32_0 = arith.constant 0 : i32
    %c0_i32_1 = arith.constant 0 : i32
    return %c0_i32, %c0_i32_0 : i32, i32
  }
  func.func @transform_9(%arg0: i32) -> (i32, i32) {
    %c0_i32 = arith.constant 0 : i32
    %c0_i32_0 = arith.constant 0 : i32
    %c0_i32_1 = arith.constant 0 : i32
    return %c0_i32, %c0_i32_0 : i32, i32
  }
  func.func @transform_10(%arg0: i32) -> (i32, i32) {
    %c0_i32 = arith.constant 0 : i32
    %c0_i32_0 = arith.constant 0 : i32
    %c0_i32_1 = arith.constant 0 : i32
    return %c0_i32, %c0_i32_0 : i32, i32
  }
  func.func @transform_11(%arg0: i32) -> (i32, i32) {
    %c0_i32 = arith.constant 0 : i32
    %c0_i32_0 = arith.constant 0 : i32
    return %arg0, %c0_i32 : i32, i32
  }
}

</mosaic_0001>

<llo_original>
// kernel: tpu_custom_call.1
$region0: #{tpu_custom_call.1}
  #allocation0 [shape = 'u32[]', space=smem, size = 0x4, offset = 0x4, fixed_abs, tag = 'smem constant byte address 0x4 - core index']
  #allocation1 [shape = 'u32[144,128]{1,0:T(1,128)}', space=vmem, size = 0x12000, scoped, tag = 'internal scratch']
  %s0 = inlined_call_operand.vmem [shape: f32[64,128], index: 0, kind: input, shape index: {}]
  %s1 = inlined_call_operand.vmem [shape: f32[128,64], index: 1, kind: input, shape index: {}]
  %s2 = inlined_call_operand.vmem [shape: f32[1,64], index: 2, kind: input, shape index: {}]
  %s3 = inlined_call_operand.vmem [shape: f32[64,128], index: 3, kind: input, shape index: {}]
  %s4 = inlined_call_operand.vmem [shape: f32[1,128], index: 4, kind: input, shape index: {}]
  %s5 = inlined_call_operand.vmem [shape: f32[128,64], index: 5, kind: input, shape index: {}]
  %s6 = inlined_call_operand.vmem [shape: f32[1,64], index: 6, kind: input, shape index: {}]
  %s7 = inlined_call_operand.vmem [shape: f32[64,32], index: 7, kind: input, shape index: {}]
  %s8 = inlined_call_operand.vmem [shape: f32[1,32], index: 8, kind: input, shape index: {}]
  %s9 = inlined_call_operand.vmem [shape: f32[32,4], index: 9, kind: input, shape index: {}]
  %s10 = inlined_call_operand.vmem [shape: f32[1,4], index: 10, kind: input, shape index: {}]
  %s11 = inlined_call_operand.vmem [shape: f32[64,4], index: 11, kind: output, shape index: {}]
  %s12 = sld [smem:[#allocation0]]
  $region77: #{tpu_custom_call.1} parent=0
    _
  %s14 = ssub.s32 1, %s12
  %s15 = scalar_select 0, %s14, %s12
  loop: start=0, step=1, limit=4
  $region2: #{tpu_custom_call.1} parent=0 // loop_pre_header
    _
  $region3: #{tpu_custom_call.1} parent=0 // loop_header
    %s17 = sphi 0, %s21
    %p18 = scmp.ge.s32.totalorder %s17, 4
    %s27 = sphi 0, %s29
    %s30 = sphi 0, %s27
    %s31 = sphi 0, %s30
    %s47 = sphi 0, %s31
    %s51 = sphi 0, %s51
    %s53 = sphi 0, %s51
    %s54 = sphi 0, %s53
    %s68 = sphi 0, %s54
    %s72 = sphi 0, %s72
    %s74 = sphi 0, %s72
    %s75 = sphi 0, %s74
    %s89 = sphi 0, %s75
    %s93 = sphi 0, %s93
    %s95 = sphi 0, %s93
    %s96 = sphi 0, %s95
    %s110 = sphi 0, %s96
    %s114 = sphi 0, %s114
    %s116 = sphi 0, %s114
    %s117 = sphi 0, %s116
    %s131 = sphi 0, %s117
    %s135 = sphi 0, %s135
    %s137 = sphi 0, %s135
    %s138 = sphi 0, %s137
    %s152 = sphi 0, %s138
    %s156 = sphi 0, %s156
    %s158 = sphi 0, %s156
    %s159 = sphi 0, %s158
    %s173 = sphi 0, %s159
    %s177 = sphi 0, %s177
    %s179 = sphi 0, %s177
    %s180 = sphi 0, %s179
    %s194 = sphi 0, %s180
    %s198 = sphi 0, %s198
    %s200 = sphi 0, %s198
    %s201 = sphi 0, %s200
    %s215 = sphi 0, %s201
    %s219 = sphi 0, %s219
    %s221 = sphi 0, %s219
    %s222 = sphi 0, %s221
    %s236 = sphi 0, %s222
    %s240 = sphi 0, %s240
    %s242 = sphi 0, %s240
    %s243 = sphi 0, %s242
    %s257 = sphi 0, %s243
    %s263 = sphi 0, %s265
    %s266 = sphi 0, %s263
    %s267 = sphi 0, %s266
    %s283 = sphi 0, %s267
  $region4: #{tpu_custom_call.1} parent=0 // loop_header_branch
    %20 = sbr.rel (%p18) target = $region8
  $region5: #{tpu_custom_call.1} parent=0 // loop_body
    %s22 = ssub.s32 %s17, 1
    %s23 = ssub.s32 %s17, 2
    %s24 = sadd.s32 %s17, 1
    %s25 = ssub.s32 %s17, %s24
    %p26 = scmp.eq.s32.totalorder %s25, 0
    %s28 = sadd.s32 %s27, 1
    %s29 = scalar_select %p26, %s27, %s28
    %p32 = pneg %p26
    %p33 = scmp.eq.s32.totalorder %s17, 1
    %p34 = por %p32, %p33
    %p35 = scmp.ne.s32.totalorder %s27, %s30
    %p36 = scmp.eq.s32.totalorder %s17, 0
    %p37 = por %p35, %p36
    %p38 = scmp.ne.s32.totalorder %s27, %s30
    %p39 = scmp.eq.s32.totalorder %s22, 1
    %p40 = por %p38, %p39
    %p41 = scmp.ne.s32.totalorder %s30, %s31
    %p42 = scmp.eq.s32.totalorder %s22, 0
    %p43 = por %p41, %p42
    %p44 = scmp.ne.s32.totalorder %s30, %s31
    %p45 = scmp.eq.s32.totalorder %s23, 1
    %p46 = por %p44, %p45
    %p48 = scmp.ne.s32.totalorder %s31, %s47
    %p49 = scmp.eq.s32.totalorder %s23, 0
    %p50 = por %p48, %p49
    %s52 = sadd.s32 %s51, 1
    %p55 = scmp.eq.s32.totalorder %s17, 1
    %p56 = scmp.ne.s32.totalorder %s51, %s53
    %p57 = scmp.eq.s32.totalorder %s17, 0
    %p58 = por %p56, %p57
    %p59 = scmp.ne.s32.totalorder %s51, %s53
    %p60 = scmp.eq.s32.totalorder %s22, 1
    %p61 = por %p59, %p60
    %p62 = scmp.ne.s32.totalorder %s53, %s54
    %p63 = scmp.eq.s32.totalorder %s22, 0
    %p64 = por %p62, %p63
    %p65 = scmp.ne.s32.totalorder %s53, %s54
    %p66 = scmp.eq.s32.totalorder %s23, 1
    %p67 = por %p65, %p66
    %p69 = scmp.ne.s32.totalorder %s54, %s68
    %p70 = scmp.eq.s32.totalorder %s23, 0
    %p71 = por %p69, %p70
    %s73 = sadd.s32 %s72, 1
    %p76 = scmp.eq.s32.totalorder %s17, 1
    %p77 = scmp.ne.s32.totalorder %s72, %s74
    %p78 = scmp.eq.s32.totalorder %s17, 0
    %p79 = por %p77, %p78
    %p80 = scmp.ne.s32.totalorder %s72, %s74
    %p81 = scmp.eq.s32.totalorder %s22, 1
    %p82 = por %p80, %p81
    %p83 = scmp.ne.s32.totalorder %s74, %s75
    %p84 = scmp.eq.s32.totalorder %s22, 0
    %p85 = por %p83, %p84
    %p86 = scmp.ne.s32.totalorder %s74, %s75
    %p87 = scmp.eq.s32.totalorder %s23, 1
    %p88 = por %p86, %p87
    %p90 = scmp.ne.s32.totalorder %s75, %s89
    %p91 = scmp.eq.s32.totalorder %s23, 0
    %p92 = por %p90, %p91
    %s94 = sadd.s32 %s93, 1
    %p97 = scmp.eq.s32.totalorder %s17, 1
    %p98 = scmp.ne.s32.totalorder %s93, %s95
    %p99 = scmp.eq.s32.totalorder %s17, 0
    %p100 = por %p98, %p99
    %p101 = scmp.ne.s32.totalorder %s93, %s95
    %p102 = scmp.eq.s32.totalorder %s22, 1
    %p103 = por %p101, %p102
    %p104 = scmp.ne.s32.totalorder %s95, %s96
    %p105 = scmp.eq.s32.totalorder %s22, 0
    %p106 = por %p104, %p105
    %p107 = scmp.ne.s32.totalorder %s95, %s96
    %p108 = scmp.eq.s32.totalorder %s23, 1
    %p109 = por %p107, %p108
    %p111 = scmp.ne.s32.totalorder %s96, %s110
    %p112 = scmp.eq.s32.totalorder %s23, 0
    %p113 = por %p111, %p112
    %s115 = sadd.s32 %s114, 1
    %p118 = scmp.eq.s32.totalorder %s17, 1
    %p119 = scmp.ne.s32.totalorder %s114, %s116
    %p120 = scmp.eq.s32.totalorder %s17, 0
    %p121 = por %p119, %p120
    %p122 = scmp.ne.s32.totalorder %s114, %s116
    %p123 = scmp.eq.s32.totalorder %s22, 1
    %p124 = por %p122, %p123
    %p125 = scmp.ne.s32.totalorder %s116, %s117
    %p126 = scmp.eq.s32.totalorder %s22, 0
    %p127 = por %p125, %p126
    %p128 = scmp.ne.s32.totalorder %s116, %s117
    %p129 = scmp.eq.s32.totalorder %s23, 1
    %p130 = por %p128, %p129
    %p132 = scmp.ne.s32.totalorder %s117, %s131
    %p133 = scmp.eq.s32.totalorder %s23, 0
    %p134 = por %p132, %p133
    %s136 = sadd.s32 %s135, 1
    %p139 = scmp.eq.s32.totalorder %s17, 1
    %p140 = scmp.ne.s32.totalorder %s135, %s137
    %p141 = scmp.eq.s32.totalorder %s17, 0
    %p142 = por %p140, %p141
    %p143 = scmp.ne.s32.totalorder %s135, %s137
    %p144 = scmp.eq.s32.totalorder %s22, 1
    %p145 = por %p143, %p144
    %p146 = scmp.ne.s32.totalorder %s137, %s138
    %p147 = scmp.eq.s32.totalorder %s22, 0
    %p148 = por %p146, %p147
    %p149 = scmp.ne.s32.totalorder %s137, %s138
    %p150 = scmp.eq.s32.totalorder %s23, 1
    %p151 = por %p149, %p150
    %p153 = scmp.ne.s32.totalorder %s138, %s152
    %p154 = scmp.eq.s32.totalorder %s23, 0
    %p155 = por %p153, %p154
    %s157 = sadd.s32 %s156, 1
    %p160 = scmp.eq.s32.totalorder %s17, 1
    %p161 = scmp.ne.s32.totalorder %s156, %s158
    %p162 = scmp.eq.s32.totalorder %s17, 0
    %p163 = por %p161, %p162
    %p164 = scmp.ne.s32.totalorder %s156, %s158
    %p165 = scmp.eq.s32.totalorder %s22, 1
    %p166 = por %p164, %p165
    %p167 = scmp.ne.s32.totalorder %s158, %s159
    %p168 = scmp.eq.s32.totalorder %s22, 0
    %p169 = por %p167, %p168
    %p170 = scmp.ne.s32.totalorder %s158, %s159
    %p171 = scmp.eq.s32.totalorder %s23, 1
    %p172 = por %p170, %p171
    %p174 = scmp.ne.s32.totalorder %s159, %s173
    %p175 = scmp.eq.s32.totalorder %s23, 0
    %p176 = por %p174, %p175
    %s178 = sadd.s32 %s177, 1
    %p181 = scmp.eq.s32.totalorder %s17, 1
    %p182 = scmp.ne.s32.totalorder %s177, %s179
    %p183 = scmp.eq.s32.totalorder %s17, 0
    %p184 = por %p182, %p183
    %p185 = scmp.ne.s32.totalorder %s177, %s179
    %p186 = scmp.eq.s32.totalorder %s22, 1
    %p187 = por %p185, %p186
    %p188 = scmp.ne.s32.totalorder %s179, %s180
    %p189 = scmp.eq.s32.totalorder %s22, 0
    %p190 = por %p188, %p189
    %p191 = scmp.ne.s32.totalorder %s179, %s180
    %p192 = scmp.eq.s32.totalorder %s23, 1
    %p193 = por %p191, %p192
    %p195 = scmp.ne.s32.totalorder %s180, %s194
    %p196 = scmp.eq.s32.totalorder %s23, 0
    %p197 = por %p195, %p196
    %s199 = sadd.s32 %s198, 1
    %p202 = scmp.eq.s32.totalorder %s17, 1
    %p203 = scmp.ne.s32.totalorder %s198, %s200
    %p204 = scmp.eq.s32.totalorder %s17, 0
    %p205 = por %p203, %p204
    %p206 = scmp.ne.s32.totalorder %s198, %s200
    %p207 = scmp.eq.s32.totalorder %s22, 1
    %p208 = por %p206, %p207
    %p209 = scmp.ne.s32.totalorder %s200, %s201
    %p210 = scmp.eq.s32.totalorder %s22, 0
    %p211 = por %p209, %p210
    %p212 = scmp.ne.s32.totalorder %s200, %s201
    %p213 = scmp.eq.s32.totalorder %s23, 1
    %p214 = por %p212, %p213
    %p216 = scmp.ne.s32.totalorder %s201, %s215
    %p217 = scmp.eq.s32.totalorder %s23, 0
    %p218 = por %p216, %p217
    %s220 = sadd.s32 %s219, 1
    %p223 = scmp.eq.s32.totalorder %s17, 1
    %p224 = scmp.ne.s32.totalorder %s219, %s221
    %p225 = scmp.eq.s32.totalorder %s17, 0
    %p226 = por %p224, %p225
    %p227 = scmp.ne.s32.totalorder %s219, %s221
    %p228 = scmp.eq.s32.totalorder %s22, 1
    %p229 = por %p227, %p228
    %p230 = scmp.ne.s32.totalorder %s221, %s222
    %p231 = scmp.eq.s32.totalorder %s22, 0
    %p232 = por %p230, %p231
    %p233 = scmp.ne.s32.totalorder %s221, %s222
    %p234 = scmp.eq.s32.totalorder %s23, 1
    %p235 = por %p233, %p234
    %p237 = scmp.ne.s32.totalorder %s222, %s236
    %p238 = scmp.eq.s32.totalorder %s23, 0
    %p239 = por %p237, %p238
    %s241 = sadd.s32 %s240, 1
    %p244 = scmp.eq.s32.totalorder %s17, 1
    %p245 = scmp.ne.s32.totalorder %s240, %s242
    %p246 = scmp.eq.s32.totalorder %s17, 0
    %p247 = por %p245, %p246
    %p248 = scmp.ne.s32.totalorder %s240, %s242
    %p249 = scmp.eq.s32.totalorder %s22, 1
    %p250 = por %p248, %p249
    %p251 = scmp.ne.s32.totalorder %s242, %s243
    %p252 = scmp.eq.s32.totalorder %s22, 0
    %p253 = por %p251, %p252
    %p254 = scmp.ne.s32.totalorder %s242, %s243
    %p255 = scmp.eq.s32.totalorder %s23, 1
    %p256 = por %p254, %p255
    %p258 = scmp.ne.s32.totalorder %s243, %s257
    %p259 = scmp.eq.s32.totalorder %s23, 0
    %p260 = por %p258, %p259
    %s261 = ssub.s32 %s17, %s24
    %p262 = scmp.eq.s32.totalorder %s261, 0
    %s264 = sadd.s32 %s263, 1
    %s265 = scalar_select %p262, %s263, %s264
    %p268 = pneg %p262
    %p269 = scmp.eq.s32.totalorder %s17, 1
    %p270 = por %p268, %p269
    %p271 = scmp.ne.s32.totalorder %s263, %s266
    %p272 = scmp.eq.s32.totalorder %s17, 0
    %p273 = por %p271, %p272
    %p274 = scmp.ne.s32.totalorder %s263, %s266
    %p275 = scmp.eq.s32.totalorder %s22, 1
    %p276 = por %p274, %p275
    %p277 = scmp.ne.s32.totalorder %s266, %s267
    %p278 = scmp.eq.s32.totalorder %s22, 0
    %p279 = por %p277, %p278
    %p280 = scmp.ne.s32.totalorder %s266, %s267
    %p281 = scmp.eq.s32.totalorder %s23, 1
    %p282 = por %p280, %p281
    %p284 = scmp.ne.s32.totalorder %s267, %s283
    %p285 = scmp.eq.s32.totalorder %s23, 0
    %p286 = por %p284, %p285
    %p287 = scmp.le.s32.totalorder 1, %s17
    %p288 = scmp.lt.s32.totalorder %s17, 3
    %p289 = pnand %p287, %p288
    %p290 = pneg %p289
    // Predicated region
    $region9: #{tpu_custom_call.1} parent=5 // pred_check
      _
    $region10: #{tpu_custom_call.1} parent=5 // pred_check_branch
      %292 = sbr.rel (%p289) target = $region12
    $region11: #{tpu_custom_call.1} parent=5 // pred_region
      %s293 = ssub.s32 %s17, 1
      // Predicated region
      $region13: #{tpu_custom_call.1} parent=11 // pred_check
        %p294 = pneg %p64
      $region14: #{tpu_custom_call.1} parent=11 // pred_check_branch
        %296 = sbr.rel (%p294) target = $region16
      $region15: #{tpu_custom_call.1} parent=11 // pred_region
        _
      $region16: #{tpu_custom_call.1} parent=11 // pred_fallthru
        _
      // Predicated region
      $region17: #{tpu_custom_call.1} parent=11 // pred_check
        %p297 = pneg %p85
      $region18: #{tpu_custom_call.1} parent=11 // pred_check_branch
        %299 = sbr.rel (%p297) target = $region20
      $region19: #{tpu_custom_call.1} parent=11 // pred_region
        _
      $region20: #{tpu_custom_call.1} parent=11 // pred_fallthru
        _
      // Predicated region
      $region21: #{tpu_custom_call.1} parent=11 // pred_check
        %p300 = pneg %p106
      $region22: #{tpu_custom_call.1} parent=11 // pred_check_branch
        %302 = sbr.rel (%p300) target = $region24
      $region23: #{tpu_custom_call.1} parent=11 // pred_region
        _
      $region24: #{tpu_custom_call.1} parent=11 // pred_fallthru
        _
      // Predicated region
      $region25: #{tpu_custom_call.1} parent=11 // pred_check
        %p303 = pneg %p127
      $region26: #{tpu_custom_call.1} parent=11 // pred_check_branch
        %305 = sbr.rel (%p303) target = $region28
      $region27: #{tpu_custom_call.1} parent=11 // pred_region
        _
      $region28: #{tpu_custom_call.1} parent=11 // pred_fallthru
        _
      // Predicated region
      $region29: #{tpu_custom_call.1} parent=11 // pred_check
        %p306 = pneg %p148
      $region30: #{tpu_custom_call.1} parent=11 // pred_check_branch
        %308 = sbr.rel (%p306) target = $region32
      $region31: #{tpu_custom_call.1} parent=11 // pred_region
        _
      $region32: #{tpu_custom_call.1} parent=11 // pred_fallthru
        _
      // Predicated region
      $region33: #{tpu_custom_call.1} parent=11 // pred_check
        %p309 = pneg %p169
      $region34: #{tpu_custom_call.1} parent=11 // pred_check_branch
        %311 = sbr.rel (%p309) target = $region36
      $region35: #{tpu_custom_call.1} parent=11 // pred_region
        _
      $region36: #{tpu_custom_call.1} parent=11 // pred_fallthru
        _
      // Predicated region
      $region37: #{tpu_custom_call.1} parent=11 // pred_check
        %p312 = pneg %p190
      $region38: #{tpu_custom_call.1} parent=11 // pred_check_branch
        %314 = sbr.rel (%p312) target = $region40
      $region39: #{tpu_custom_call.1} parent=11 // pred_region
        _
      $region40: #{tpu_custom_call.1} parent=11 // pred_fallthru
        _
      // Predicated region
      $region41: #{tpu_custom_call.1} parent=11 // pred_check
        %p315 = pneg %p211
      $region42: #{tpu_custom_call.1} parent=11 // pred_check_branch
        %317 = sbr.rel (%p315) target = $region44
      $region43: #{tpu_custom_call.1} parent=11 // pred_region
        _
      $region44: #{tpu_custom_call.1} parent=11 // pred_fallthru
        _
      // Predicated region
      $region45: #{tpu_custom_call.1} parent=11 // pred_check
        %p318 = pneg %p232
      $region46: #{tpu_custom_call.1} parent=11 // pred_check_branch
        %320 = sbr.rel (%p318) target = $region48
      $region47: #{tpu_custom_call.1} parent=11 // pred_region
        _
      $region48: #{tpu_custom_call.1} parent=11 // pred_fallthru
        _
      // Predicated region
      $region49: #{tpu_custom_call.1} parent=11 // pred_check
        %p321 = pneg %p253
      $region50: #{tpu_custom_call.1} parent=11 // pred_check_branch
        %323 = sbr.rel (%p321) target = $region52
      $region51: #{tpu_custom_call.1} parent=11 // pred_region
        _
      $region52: #{tpu_custom_call.1} parent=11 // pred_fallthru
        _
    $region12: #{tpu_custom_call.1} parent=5 // pred_fallthru
      _
    %p324 = scmp.lt.s32.totalorder %s17, 2
    // Predicated region
    $region53: #{tpu_custom_call.1} parent=5 // pred_check
      %p325 = pneg %p324
    $region54: #{tpu_custom_call.1} parent=5 // pred_check_branch
      %327 = sbr.rel (%p325) target = $region56
    $region55: #{tpu_custom_call.1} parent=5 // pred_region
      // Predicated region
      $region57: #{tpu_custom_call.1} parent=55 // pred_check
        %p328 = pneg %p37
      $region58: #{tpu_custom_call.1} parent=55 // pred_check_branch
        %330 = sbr.rel (%p328) target = $region60
      $region59: #{tpu_custom_call.1} parent=55 // pred_region
        %s331 = smul.u32 4, %s17
        %p332 = scmp.lt.s32.totalorder %s331, 7
        %s333 = scalar_select %p332, %s331, 7
        %s334 = smul.addr %s333, 8
        %s335 = scalar_lea.vmem %s0, %s334
        %s336 = smul.u32 4, %s17
      $region60: #{tpu_custom_call.1} parent=55 // pred_fallthru
        _
    $region56: #{tpu_custom_call.1} parent=5 // pred_fallthru
      _
    %p337 = scmp.le.s32.totalorder 1, %s17
    %p338 = scmp.lt.s32.totalorder %s17, 3
    %p339 = pnand %p337, %p338
    %p340 = pneg %p339
    // Predicated region
    $region61: #{tpu_custom_call.1} parent=5 // pred_check
      _
    $region62: #{tpu_custom_call.1} parent=5 // pred_check_branch
      %342 = sbr.rel (%p339) target = $region64
    $region63: #{tpu_custom_call.1} parent=5 // pred_region
      %s343 = ssub.s32 %s17, 1
      %s344 = smul.u32 4, %s22
      %p345 = scmp.lt.s32.totalorder %s344, 7
      %s346 = scalar_select %p345, %s344, 7
      %s347 = smul.addr %s346, 8
      %s348 = scalar_lea.vmem %s0, %s347
      %p349 = pneg %p43
      %p350 = pneg %p40
      %p351 = pneg %p64
      %p352 = pneg %p61
      %p353 = pneg %p85
      %p354 = pneg %p82
      %p355 = pneg %p106
      %p356 = pneg %p103
      %p357 = pneg %p127
      %p358 = pneg %p124
      %p359 = pneg %p148
      %p360 = pneg %p145
      %p361 = pneg %p169
      %p362 = pneg %p166
      %p363 = pneg %p190
      %p364 = pneg %p187
      %p365 = pneg %p211
      %p366 = pneg %p208
      %p367 = pneg %p232
      %p368 = pneg %p229
      %p369 = pneg %p253
      %p370 = pneg %p250
      %p371 = pneg %p279
      %p372 = pneg %p276
      %s373 = smul.u32 4, %s22
      %p374 = scmp.lt.s32.totalorder %s373, 7
      %s375 = scalar_select %p374, %s373, 7
      %s376 = smul.addr %s375, 8
      %s377 = scalar_lea.vmem %s11, %s376
      %s378 = smul.u32 4, %s22
      %p379 = scmp.lt.s32.totalorder %s378, 7
      %s380 = scalar_select %p379, %s378, 7
      %s381 = smul.addr %s380, 8
      %s382 = scalar_lea.vmem %s0, %s381
      %s383 = smul.u32 4, %s22
      %s384 = smul.u32 4, %s22
      %p385 = scmp.lt.s32.totalorder %s384, 7
      %s386 = scalar_select %p385, %s384, 7
      %s387 = smul.addr %s386, 8
      %s388 = scalar_lea.vmem %s11, %s387
      %s389 = smul.u32 4, %s22
      %v390 = vld [vmem:[%s382] sm:$0xff]
      %v391 = vld [vmem:[%s382 + $0x8] sm:$0xff]
      %v392 = vld [vmem:[%s382 + $0x10] sm:$0xff]
      %v393 = vld [vmem:[%s382 + $0x18] sm:$0xff]
      %v394 = vld [vmem:[%s1] sm:$0xff]
      %v395 = vld [vmem:[%s1 + $0x8] sm:$0xff]
      %v396 = vld [vmem:[%s1 + $0x10] sm:$0xff]
      %v397 = vld [vmem:[%s1 + $0x18] sm:$0xff]
      %v398 = vld [vmem:[%s1 + $0x20] sm:$0xff]
      %v399 = vld [vmem:[%s1 + $0x28] sm:$0xff]
      %v400 = vld [vmem:[%s1 + $0x30] sm:$0xff]
      %v401 = vld [vmem:[%s1 + $0x38] sm:$0xff]
      %v402 = vld [vmem:[%s1 + $0x40] sm:$0xff]
      %v403 = vld [vmem:[%s1 + $0x48] sm:$0xff]
      %v404 = vld [vmem:[%s1 + $0x50] sm:$0xff]
      %v405 = vld [vmem:[%s1 + $0x58] sm:$0xff]
      %v406 = vld [vmem:[%s1 + $0x60] sm:$0xff]
      %v407 = vld [vmem:[%s1 + $0x68] sm:$0xff]
      %v408 = vld [vmem:[%s1 + $0x70] sm:$0xff]
      %v409 = vld [vmem:[%s1 + $0x78] sm:$0xff]
      %v410 = vld [vmem:[%s2] sm:$0x1]
      %v412 = vlaneseq
      %v413 = vshrl.u32 %v412, 7
      %v414 = vsub.s32 0, %v413
      %v415 = vrot.slane %v410, %v414
      %417 = vmatprep.subr.mxu0 0.0
      %418 = vmatpush1.msra.mxu0 %v409
      %419 = vmatprep.subr.mxu0 0.0
      %420 = vmatpush1.msra.mxu0 %v408
      %421 = vmatprep.subr.mxu0 0.0
      %422 = vmatpush1.msra.mxu0 %v407
      %423 = vmatprep.subr.mxu0 0.0
      %424 = vmatpush1.msra.mxu0 %v406
      %425 = vmatprep.subr.mxu0 0.0
      %426 = vmatpush1.msra.mxu0 %v405
      %427 = vmatprep.subr.mxu0 0.0
      %428 = vmatpush1.msra.mxu0 %v404
      %429 = vmatprep.subr.mxu0 0.0
      %430 = vmatpush1.msra.mxu0 %v403
      %431 = vmatprep.subr.mxu0 0.0
      %432 = vmatpush1.msra.mxu0 %v402
      %433 = vmatprep.subr.mxu0 0.0
      %434 = vmatpush1.msra.mxu0 %v401
      %435 = vmatprep.subr.mxu0 0.0
      %436 = vmatpush1.msra.mxu0 %v400
      %437 = vmatprep.subr.mxu0 0.0
      %438 = vmatpush1.msra.mxu0 %v399
      %439 = vmatprep.subr.mxu0 0.0
      %440 = vmatpush1.msra.mxu0 %v398
      %441 = vmatprep.subr.mxu0 0.0
      %442 = vmatpush1.msra.mxu0 %v397
      %443 = vmatprep.subr.mxu0 0.0
      %444 = vmatpush1.msra.mxu0 %v396
      %445 = vmatprep.subr.mxu0 0.0
      %446 = vmatpush1.msra.mxu0 %v395
      %447 = vmatprep.subr.mxu0 0.0
      %448 = vmatpush1.msra.mxu0 %v394
      %449 = vmatprep.subr.mxu0 0.0
      %450 = vmatpush2.msra.mxu0 0.0
      %451 = vmatprep.subr.mxu0 0.0
      %452 = vmatpush2.msra.mxu0 0.0
      %453 = vmatprep.subr.mxu0 0.0
      %454 = vmatpush2.msra.mxu0 0.0
      %455 = vmatprep.subr.mxu0 0.0
      %456 = vmatpush2.msra.mxu0 0.0
      %457 = vmatprep.subr.mxu0 0.0
      %458 = vmatpush2.msra.mxu0 0.0
      %459 = vmatprep.subr.mxu0 0.0
      %460 = vmatpush2.msra.mxu0 0.0
      %461 = vmatprep.subr.mxu0 0.0
      %462 = vmatpush2.msra.mxu0 0.0
      %463 = vmatprep.subr.mxu0 0.0
      %464 = vmatpush2.msra.mxu0 0.0
      %465 = vmatprep.subr.mxu0 0.0
      %466 = vmatpush2.msra.mxu0 0.0
      %467 = vmatprep.subr.mxu0 0.0
      %468 = vmatpush2.msra.mxu0 0.0
      %469 = vmatprep.subr.mxu0 0.0
      %470 = vmatpush2.msra.mxu0 0.0
      %471 = vmatprep.subr.mxu0 0.0
      %472 = vmatpush2.msra.mxu0 0.0
      %473 = vmatprep.subr.mxu0 0.0
      %474 = vmatpush2.msra.mxu0 0.0
      %475 = vmatprep.subr.mxu0 0.0
      %476 = vmatpush2.msra.mxu0 0.0
      %477 = vmatprep.subr.mxu0 0.0
      %478 = vmatpush2.msra.mxu0 0.0
      %479 = vmatprep.subr.mxu0 0.0
      %480 = vmatpush2.msra.mxu0 0.0
      %481 = vmatprep.mubr.f32.mxu0 0.0
      %482 = vmatmul.mubr.f32.gmra.mxu0 %v390
      %v483 = vpop.f32.mrf.mxu0
      %v484 = vadd.f32 %v415, %v483
      %v485 = vpop.f32.mrf.mxu0
      %486 = vmatprep.mubr.f32.mxu0 0.0
      %487 = vmatmul.mubr.f32.gmra.mxu0 %v391
      %v488 = vpop.f32.mrf.mxu0
      %v489 = vadd.f32 %v415, %v488
      %v490 = vpop.f32.mrf.mxu0
      %491 = vmatprep.mubr.f32.mxu0 0.0
      %492 = vmatmul.mubr.f32.gmra.mxu0 %v392
      %v493 = vpop.f32.mrf.mxu0
      %v494 = vadd.f32 %v415, %v493
      %v495 = vpop.f32.mrf.mxu0
      %496 = vmatprep.mubr.f32.mxu0 0.0
      %497 = vmatmul.mubr.f32.gmra.mxu0 %v393
      %v498 = vpop.f32.mrf.mxu0
      %v499 = vadd.f32 %v415, %v498
      %v500 = vpop.f32.mrf.mxu0
      %501 = vdwg.mxu0
      %v502 = vmax.f32 %v484, 0.0
      %v503 = vmax.f32 %v489, 0.0
      %v504 = vmax.f32 %v494, 0.0
      %v505 = vmax.f32 %v499, 0.0
      %v506 = vld [vmem:[%s3] sm:$0xff]
      %v507 = vld [vmem:[%s3 + $0x8] sm:$0xff]
      %v508 = vld [vmem:[%s3 + $0x10] sm:$0xff]
      %v509 = vld [vmem:[%s3 + $0x18] sm:$0xff]
      %v510 = vld [vmem:[%s3 + $0x20] sm:$0xff]
      %v511 = vld [vmem:[%s3 + $0x28] sm:$0xff]
      %v512 = vld [vmem:[%s3 + $0x30] sm:$0xff]
      %v513 = vld [vmem:[%s3 + $0x38] sm:$0xff]
      %v514 = vld [vmem:[%s4] sm:$0x1]
      %v516 = vlaneseq
      %v517 = vshrl.u32 %v516, 7
      %v518 = vsub.s32 0, %v517
      %v519 = vrot.slane %v514, %v518
      %vm521 = vcmask 523264
      %v523 = vsel %vm521, %v502, 0
      %v526 = vsel %vm521, %v503, 0
      %v529 = vsel %vm521, %v504, 0
      %v532 = vsel %vm521, %v505, 0
      %534 = vmatprep.subr.mxu0 0.0
      %535 = vmatpush1.msra.mxu0 0.0
      %536 = vmatprep.subr.mxu0 0.0
      %537 = vmatpush1.msra.mxu0 0.0
      %538 = vmatprep.subr.mxu0 0.0
      %539 = vmatpush1.msra.mxu0 0.0
      %540 = vmatprep.subr.mxu0 0.0
      %541 = vmatpush1.msra.mxu0 0.0
      %542 = vmatprep.subr.mxu0 0.0
      %543 = vmatpush1.msra.mxu0 0.0
      %544 = vmatprep.subr.mxu0 0.0
      %545 = vmatpush1.msra.mxu0 0.0
      %546 = vmatprep.subr.mxu0 0.0
      %547 = vmatpush1.msra.mxu0 0.0
      %548 = vmatprep.subr.mxu0 0.0
      %549 = vmatpush1.msra.mxu0 0.0
      %550 = vmatprep.subr.mxu0 0.0
      %551 = vmatpush1.msra.mxu0 %v513
      %552 = vmatprep.subr.mxu0 0.0
      %553 = vmatpush1.msra.mxu0 %v512
      %554 = vmatprep.subr.mxu0 0.0
      %555 = vmatpush1.msra.mxu0 %v511
      %556 = vmatprep.subr.mxu0 0.0
      %557 = vmatpush1.msra.mxu0 %v510
      %558 = vmatprep.subr.mxu0 0.0
      %559 = vmatpush1.msra.mxu0 %v509
      %560 = vmatprep.subr.mxu0 0.0
      %561 = vmatpush1.msra.mxu0 %v508
      %562 = vmatprep.subr.mxu0 0.0
      %563 = vmatpush1.msra.mxu0 %v507
      %564 = vmatprep.subr.mxu0 0.0
      %565 = vmatpush1.msra.mxu0 %v506
      %566 = vmatprep.subr.mxu0 0.0
      %567 = vmatpush2.msra.mxu0 0.0
      %568 = vmatprep.subr.mxu0 0.0
      %569 = vmatpush2.msra.mxu0 0.0
      %570 = vmatprep.subr.mxu0 0.0
      %571 = vmatpush2.msra.mxu0 0.0
      %572 = vmatprep.subr.mxu0 0.0
      %573 = vmatpush2.msra.mxu0 0.0
      %574 = vmatprep.subr.mxu0 0.0
      %575 = vmatpush2.msra.mxu0 0.0
      %576 = vmatprep.subr.mxu0 0.0
      %577 = vmatpush2.msra.mxu0 0.0
      %578 = vmatprep.subr.mxu0 0.0
      %579 = vmatpush2.msra.mxu0 0.0
      %580 = vmatprep.subr.mxu0 0.0
      %581 = vmatpush2.msra.mxu0 0.0
      %582 = vmatprep.subr.mxu0 0.0
      %583 = vmatpush2.msra.mxu0 0.0
      %584 = vmatprep.subr.mxu0 0.0
      %585 = vmatpush2.msra.mxu0 0.0
      %586 = vmatprep.subr.mxu0 0.0
      %587 = vmatpush2.msra.mxu0 0.0
      %588 = vmatprep.subr.mxu0 0.0
      %589 = vmatpush2.msra.mxu0 0.0
      %590 = vmatprep.subr.mxu0 0.0
      %591 = vmatpush2.msra.mxu0 0.0
      %592 = vmatprep.subr.mxu0 0.0
      %593 = vmatpush2.msra.mxu0 0.0
      %594 = vmatprep.subr.mxu0 0.0
      %595 = vmatpush2.msra.mxu0 0.0
      %596 = vmatprep.subr.mxu0 0.0
      %597 = vmatpush2.msra.mxu0 0.0
      %598 = vmatprep.mubr.f32.mxu0 0.0
      %599 = vmatmul.mubr.f32.gmra.mxu0 %v523
      %v600 = vpop.f32.mrf.mxu0
      %v601 = vadd.f32 %v519, %v600
      %v602 = vpop.f32.mrf.mxu0
      %603 = vmatprep.mubr.f32.mxu0 0.0
      %604 = vmatmul.mubr.f32.gmra.mxu0 %v526
      %v605 = vpop.f32.mrf.mxu0
      %v606 = vadd.f32 %v519, %v605
      %v607 = vpop.f32.mrf.mxu0
      %608 = vmatprep.mubr.f32.mxu0 0.0
      %609 = vmatmul.mubr.f32.gmra.mxu0 %v529
      %v610 = vpop.f32.mrf.mxu0
      %v611 = vadd.f32 %v519, %v610
      %v612 = vpop.f32.mrf.mxu0
      %613 = vmatprep.mubr.f32.mxu0 0.0
      %614 = vmatmul.mubr.f32.gmra.mxu0 %v532
      %v615 = vpop.f32.mrf.mxu0
      %v616 = vadd.f32 %v519, %v615
      %v617 = vpop.f32.mrf.mxu0
      %618 = vdwg.mxu0
      %v619 = vmax.f32 %v601, 0.0
      %v620 = vmax.f32 %v606, 0.0
      %v621 = vmax.f32 %v611, 0.0
      %v622 = vmax.f32 %v616, 0.0
      %v623 = vld [vmem:[%s5] sm:$0xff]
      %v624 = vld [vmem:[%s5 + $0x8] sm:$0xff]
      %v625 = vld [vmem:[%s5 + $0x10] sm:$0xff]
      %v626 = vld [vmem:[%s5 + $0x18] sm:$0xff]
      %v627 = vld [vmem:[%s5 + $0x20] sm:$0xff]
      %v628 = vld [vmem:[%s5 + $0x28] sm:$0xff]
      %v629 = vld [vmem:[%s5 + $0x30] sm:$0xff]
      %v630 = vld [vmem:[%s5 + $0x38] sm:$0xff]
      %v631 = vld [vmem:[%s5 + $0x40] sm:$0xff]
      %v632 = vld [vmem:[%s5 + $0x48] sm:$0xff]
      %v633 = vld [vmem:[%s5 + $0x50] sm:$0xff]
      %v634 = vld [vmem:[%s5 + $0x58] sm:$0xff]
      %v635 = vld [vmem:[%s5 + $0x60] sm:$0xff]
      %v636 = vld [vmem:[%s5 + $0x68] sm:$0xff]
      %v637 = vld [vmem:[%s5 + $0x70] sm:$0xff]
      %v638 = vld [vmem:[%s5 + $0x78] sm:$0xff]
      %v639 = vld [vmem:[%s6] sm:$0x1]
      %v641 = vlaneseq
      %v642 = vshrl.u32 %v641, 7
      %v643 = vsub.s32 0, %v642
      %v644 = vrot.slane %v639, %v643
      %646 = vmatprep.subr.mxu0 0.0
      %647 = vmatpush1.msra.mxu0 %v638
      %648 = vmatprep.subr.mxu0 0.0
      %649 = vmatpush1.msra.mxu0 %v637
      %650 = vmatprep.subr.mxu0 0.0
      %651 = vmatpush1.msra.mxu0 %v636
      %652 = vmatprep.subr.mxu0 0.0
      %653 = vmatpush1.msra.mxu0 %v635
      %654 = vmatprep.subr.mxu0 0.0
      %655 = vmatpush1.msra.mxu0 %v634
      %656 = vmatprep.subr.mxu0 0.0
      %657 = vmatpush1.msra.mxu0 %v633
      %658 = vmatprep.subr.mxu0 0.0
      %659 = vmatpush1.msra.mxu0 %v632
      %660 = vmatprep.subr.mxu0 0.0
      %661 = vmatpush1.msra.mxu0 %v631
      %662 = vmatprep.subr.mxu0 0.0
      %663 = vmatpush1.msra.mxu0 %v630
      %664 = vmatprep.subr.mxu0 0.0
      %665 = vmatpush1.msra.mxu0 %v629
      %666 = vmatprep.subr.mxu0 0.0
      %667 = vmatpush1.msra.mxu0 %v628
      %668 = vmatprep.subr.mxu0 0.0
      %669 = vmatpush1.msra.mxu0 %v627
      %670 = vmatprep.subr.mxu0 0.0
      %671 = vmatpush1.msra.mxu0 %v626
      %672 = vmatprep.subr.mxu0 0.0
      %673 = vmatpush1.msra.mxu0 %v625
      %674 = vmatprep.subr.mxu0 0.0
      %675 = vmatpush1.msra.mxu0 %v624
      %676 = vmatprep.subr.mxu0 0.0
      %677 = vmatpush1.msra.mxu0 %v623
      %678 = vmatprep.subr.mxu0 0.0
      %679 = vmatpush2.msra.mxu0 0.0
      %680 = vmatprep.subr.mxu0 0.0
      %681 = vmatpush2.msra.mxu0 0.0
      %682 = vmatprep.subr.mxu0 0.0
      %683 = vmatpush2.msra.mxu0 0.0
      %684 = vmatprep.subr.mxu0 0.0
      %685 = vmatpush2.msra.mxu0 0.0
      %686 = vmatprep.subr.mxu0 0.0
      %687 = vmatpush2.msra.mxu0 0.0
      %688 = vmatprep.subr.mxu0 0.0
      %689 = vmatpush2.msra.mxu0 0.0
      %690 = vmatprep.subr.mxu0 0.0
      %691 = vmatpush2.msra.mxu0 0.0
      %692 = vmatprep.subr.mxu0 0.0
      %693 = vmatpush2.msra.mxu0 0.0
      %694 = vmatprep.subr.mxu0 0.0
      %695 = vmatpush2.msra.mxu0 0.0
      %696 = vmatprep.subr.mxu0 0.0
      %697 = vmatpush2.msra.mxu0 0.0
      %698 = vmatprep.subr.mxu0 0.0
      %699 = vmatpush2.msra.mxu0 0.0
      %700 = vmatprep.subr.mxu0 0.0
      %701 = vmatpush2.msra.mxu0 0.0
      %702 = vmatprep.subr.mxu0 0.0
      %703 = vmatpush2.msra.mxu0 0.0
      %704 = vmatprep.subr.mxu0 0.0
      %705 = vmatpush2.msra.mxu0 0.0
      %706 = vmatprep.subr.mxu0 0.0
      %707 = vmatpush2.msra.mxu0 0.0
      %708 = vmatprep.subr.mxu0 0.0
      %709 = vmatpush2.msra.mxu0 0.0
      %710 = vmatprep.mubr.f32.mxu0 0.0
      %711 = vmatmul.mubr.f32.gmra.mxu0 %v619
      %v712 = vpop.f32.mrf.mxu0
      %v713 = vadd.f32 %v644, %v712
      %v714 = vpop.f32.mrf.mxu0
      %715 = vmatprep.mubr.f32.mxu0 0.0
      %716 = vmatmul.mubr.f32.gmra.mxu0 %v620
      %v717 = vpop.f32.mrf.mxu0
      %v718 = vadd.f32 %v644, %v717
      %v719 = vpop.f32.mrf.mxu0
      %720 = vmatprep.mubr.f32.mxu0 0.0
      %721 = vmatmul.mubr.f32.gmra.mxu0 %v621
      %v722 = vpop.f32.mrf.mxu0
      %v723 = vadd.f32 %v644, %v722
      %v724 = vpop.f32.mrf.mxu0
      %725 = vmatprep.mubr.f32.mxu0 0.0
      %726 = vmatmul.mubr.f32.gmra.mxu0 %v622
      %v727 = vpop.f32.mrf.mxu0
      %v728 = vadd.f32 %v644, %v727
      %v729 = vpop.f32.mrf.mxu0
      %730 = vdwg.mxu0
      %v731 = vmax.f32 %v713, 0.0
      %v732 = vmax.f32 %v718, 0.0
      %v733 = vmax.f32 %v723, 0.0
      %v734 = vmax.f32 %v728, 0.0
      %v735 = vld [vmem:[%s7] sm:$0xff]
      %v736 = vld [vmem:[%s7 + $0x8] sm:$0xff]
      %v737 = vld [vmem:[%s7 + $0x10] sm:$0xff]
      %v738 = vld [vmem:[%s7 + $0x18] sm:$0xff]
      %v739 = vld [vmem:[%s7 + $0x20] sm:$0xff]
      %v740 = vld [vmem:[%s7 + $0x28] sm:$0xff]
      %v741 = vld [vmem:[%s7 + $0x30] sm:$0xff]
      %v742 = vld [vmem:[%s7 + $0x38] sm:$0xff]
      %v743 = vld [vmem:[%s8] sm:$0x1]
      %v745 = vlaneseq
      %v746 = vshrl.u32 %v745, 7
      %v747 = vsub.s32 0, %v746
      %v748 = vrot.slane %v743, %v747
      %v751 = vsel %vm521, %v731, 0
      %v754 = vsel %vm521, %v732, 0
      %v757 = vsel %vm521, %v733, 0
      %v760 = vsel %vm521, %v734, 0
      %762 = vmatprep.subr.mxu0 0.0
      %763 = vmatpush1.msra.mxu0 0.0
      %764 = vmatprep.subr.mxu0 0.0
      %765 = vmatpush1.msra.mxu0 0.0
      %766 = vmatprep.subr.mxu0 0.0
      %767 = vmatpush1.msra.mxu0 0.0
      %768 = vmatprep.subr.mxu0 0.0
      %769 = vmatpush1.msra.mxu0 0.0
      %770 = vmatprep.subr.mxu0 0.0
      %771 = vmatpush1.msra.mxu0 0.0
      %772 = vmatprep.subr.mxu0 0.0
      %773 = vmatpush1.msra.mxu0 0.0
      %774 = vmatprep.subr.mxu0 0.0
      %775 = vmatpush1.msra.mxu0 0.0
      %776 = vmatprep.subr.mxu0 0.0
      %777 = vmatpush1.msra.mxu0 0.0
      %778 = vmatprep.subr.mxu0 0.0
      %779 = vmatpush1.msra.mxu0 %v742
      %780 = vmatprep.subr.mxu0 0.0
      %781 = vmatpush1.msra.mxu0 %v741
      %782 = vmatprep.subr.mxu0 0.0
      %783 = vmatpush1.msra.mxu0 %v740
      %784 = vmatprep.subr.mxu0 0.0
      %785 = vmatpush1.msra.mxu0 %v739
      %786 = vmatprep.subr.mxu0 0.0
      %787 = vmatpush1.msra.mxu0 %v738
      %788 = vmatprep.subr.mxu0 0.0
      %789 = vmatpush1.msra.mxu0 %v737
      %790 = vmatprep.subr.mxu0 0.0
      %791 = vmatpush1.msra.mxu0 %v736
      %792 = vmatprep.subr.mxu0 0.0
      %793 = vmatpush1.msra.mxu0 %v735
      %794 = vmatprep.subr.mxu0 0.0
      %795 = vmatpush2.msra.mxu0 0.0
      %796 = vmatprep.subr.mxu0 0.0
      %797 = vmatpush2.msra.mxu0 0.0
      %798 = vmatprep.subr.mxu0 0.0
      %799 = vmatpush2.msra.mxu0 0.0
      %800 = vmatprep.subr.mxu0 0.0
      %801 = vmatpush2.msra.mxu0 0.0
      %802 = vmatprep.subr.mxu0 0.0
      %803 = vmatpush2.msra.mxu0 0.0
      %804 = vmatprep.subr.mxu0 0.0
      %805 = vmatpush2.msra.mxu0 0.0
      %806 = vmatprep.subr.mxu0 0.0
      %807 = vmatpush2.msra.mxu0 0.0
      %808 = vmatprep.subr.mxu0 0.0
      %809 = vmatpush2.msra.mxu0 0.0
      %810 = vmatprep.subr.mxu0 0.0
      %811 = vmatpush2.msra.mxu0 0.0
      %812 = vmatprep.subr.mxu0 0.0
      %813 = vmatpush2.msra.mxu0 0.0
      %814 = vmatprep.subr.mxu0 0.0
      %815 = vmatpush2.msra.mxu0 0.0
      %816 = vmatprep.subr.mxu0 0.0
      %817 = vmatpush2.msra.mxu0 0.0
      %818 = vmatprep.subr.mxu0 0.0
      %819 = vmatpush2.msra.mxu0 0.0
      %820 = vmatprep.subr.mxu0 0.0
      %821 = vmatpush2.msra.mxu0 0.0
      %822 = vmatprep.subr.mxu0 0.0
      %823 = vmatpush2.msra.mxu0 0.0
      %824 = vmatprep.subr.mxu0 0.0
      %825 = vmatpush2.msra.mxu0 0.0
      %826 = vmatprep.mubr.f32.mxu0 0.0
      %827 = vmatmul.mubr.f32.gmra.mxu0 %v751
      %v828 = vpop.f32.mrf.mxu0
      %v829 = vadd.f32 %v748, %v828
      %v830 = vpop.f32.mrf.mxu0
      %831 = vmatprep.mubr.f32.mxu0 0.0
      %832 = vmatmul.mubr.f32.gmra.mxu0 %v754
      %v833 = vpop.f32.mrf.mxu0
      %v834 = vadd.f32 %v748, %v833
      %v835 = vpop.f32.mrf.mxu0
      %836 = vmatprep.mubr.f32.mxu0 0.0
      %837 = vmatmul.mubr.f32.gmra.mxu0 %v757
      %v838 = vpop.f32.mrf.mxu0
      %v839 = vadd.f32 %v748, %v838
      %v840 = vpop.f32.mrf.mxu0
      %841 = vmatprep.mubr.f32.mxu0 0.0
      %842 = vmatmul.mubr.f32.gmra.mxu0 %v760
      %v843 = vpop.f32.mrf.mxu0
      %v844 = vadd.f32 %v748, %v843
      %v845 = vpop.f32.mrf.mxu0
      %846 = vdwg.mxu0
      %v847 = vmax.f32 %v829, 0.0
      %v848 = vmax.f32 %v834, 0.0
      %v849 = vmax.f32 %v839, 0.0
      %v850 = vmax.f32 %v844, 0.0
      %v851 = vld [vmem:[%s9] sm:$0xff]
      %v852 = vld [vmem:[%s9 + $0x8] sm:$0xff]
      %v853 = vld [vmem:[%s9 + $0x10] sm:$0xff]
      %v854 = vld [vmem:[%s9 + $0x18] sm:$0xff]
      %v855 = vld [vmem:[%s10] sm:$0x1]
      %v857 = vlaneseq
      %v858 = vshrl.u32 %v857, 7
      %v859 = vsub.s32 0, %v858
      %v860 = vrot.slane %v855, %v859
      %vm862 = vcmask 261120
      %v864 = vsel %vm862, %v847, 0
      %v867 = vsel %vm862, %v848, 0
      %v870 = vsel %vm862, %v849, 0
      %v873 = vsel %vm862, %v850, 0
      %875 = vmatprep.subr.mxu0 0.0
      %876 = vmatpush1.msra.mxu0 0.0
      %877 = vmatprep.subr.mxu0 0.0
      %878 = vmatpush1.msra.mxu0 0.0
      %879 = vmatprep.subr.mxu0 0.0
      %880 = vmatpush1.msra.mxu0 0.0
      %881 = vmatprep.subr.mxu0 0.0
      %882 = vmatpush1.msra.mxu0 0.0
      %883 = vmatprep.subr.mxu0 0.0
      %884 = vmatpush1.msra.mxu0 0.0
      %885 = vmatprep.subr.mxu0 0.0
      %886 = vmatpush1.msra.mxu0 0.0
      %887 = vmatprep.subr.mxu0 0.0
      %888 = vmatpush1.msra.mxu0 0.0
      %889 = vmatprep.subr.mxu0 0.0
      %890 = vmatpush1.msra.mxu0 0.0
      %891 = vmatprep.subr.mxu0 0.0
      %892 = vmatpush1.msra.mxu0 0.0
      %893 = vmatprep.subr.mxu0 0.0
      %894 = vmatpush1.msra.mxu0 0.0
      %895 = vmatprep.subr.mxu0 0.0
      %896 = vmatpush1.msra.mxu0 0.0
      %897 = vmatprep.subr.mxu0 0.0
      %898 = vmatpush1.msra.mxu0 0.0
      %899 = vmatprep.subr.mxu0 0.0
      %900 = vmatpush1.msra.mxu0 %v854
      %901 = vmatprep.subr.mxu0 0.0
      %902 = vmatpush1.msra.mxu0 %v853
      %903 = vmatprep.subr.mxu0 0.0
      %904 = vmatpush1.msra.mxu0 %v852
      %905 = vmatprep.subr.mxu0 0.0
      %906 = vmatpush1.msra.mxu0 %v851
      %907 = vmatprep.subr.mxu0 0.0
      %908 = vmatpush2.msra.mxu0 0.0
      %909 = vmatprep.subr.mxu0 0.0
      %910 = vmatpush2.msra.mxu0 0.0
      %911 = vmatprep.subr.mxu0 0.0
      %912 = vmatpush2.msra.mxu0 0.0
      %913 = vmatprep.subr.mxu0 0.0
      %914 = vmatpush2.msra.mxu0 0.0
      %915 = vmatprep.subr.mxu0 0.0
      %916 = vmatpush2.msra.mxu0 0.0
      %917 = vmatprep.subr.mxu0 0.0
      %918 = vmatpush2.msra.mxu0 0.0
      %919 = vmatprep.subr.mxu0 0.0
      %920 = vmatpush2.msra.mxu0 0.0
      %921 = vmatprep.subr.mxu0 0.0
      %922 = vmatpush2.msra.mxu0 0.0
      %923 = vmatprep.subr.mxu0 0.0
      %924 = vmatpush2.msra.mxu0 0.0
      %925 = vmatprep.subr.mxu0 0.0
      %926 = vmatpush2.msra.mxu0 0.0
      %927 = vmatprep.subr.mxu0 0.0
      %928 = vmatpush2.msra.mxu0 0.0
      %929 = vmatprep.subr.mxu0 0.0
      %930 = vmatpush2.msra.mxu0 0.0
      %931 = vmatprep.subr.mxu0 0.0
      %932 = vmatpush2.msra.mxu0 0.0
      %933 = vmatprep.subr.mxu0 0.0
      %934 = vmatpush2.msra.mxu0 0.0
      %935 = vmatprep.subr.mxu0 0.0
      %936 = vmatpush2.msra.mxu0 0.0
      %937 = vmatprep.subr.mxu0 0.0
      %938 = vmatpush2.msra.mxu0 0.0
      %939 = vmatprep.mubr.f32.mxu0 0.0
      %940 = vmatmul.mubr.f32.gmra.mxu0 %v864
      %v941 = vpop.f32.mrf.mxu0
      %v942 = vadd.f32 %v860, %v941
      %v943 = vpop.f32.mrf.mxu0
      %944 = vmatprep.mubr.f32.mxu0 0.0
      %945 = vmatmul.mubr.f32.gmra.mxu0 %v867
      %v946 = vpop.f32.mrf.mxu0
      %v947 = vadd.f32 %v860, %v946
      %v948 = vpop.f32.mrf.mxu0
      %949 = vmatprep.mubr.f32.mxu0 0.0
      %950 = vmatmul.mubr.f32.gmra.mxu0 %v870
      %v951 = vpop.f32.mrf.mxu0
      %v952 = vadd.f32 %v860, %v951
      %v953 = vpop.f32.mrf.mxu0
      %954 = vmatprep.mubr.f32.mxu0 0.0
      %955 = vmatmul.mubr.f32.gmra.mxu0 %v873
      %v956 = vpop.f32.mrf.mxu0
      %v957 = vadd.f32 %v860, %v956
      %v958 = vpop.f32.mrf.mxu0
      %959 = vdwg.mxu0
      %v960 = vsub.f32 0.0, %v942
      %v961 = vsub.f32 0.0, %v947
      %v962 = vsub.f32 0.0, %v952
      %v963 = vsub.f32 0.0, %v957
      %v964 = vmul.f32 %v960, 1.442695
      %v965 = vpow.pop %v964
      %v966 = vmul.f32 %v961, 1.442695
      %v967 = vpow.pop %v966
      %v968 = vmul.f32 %v962, 1.442695
      %v969 = vpow.pop %v968
      %v970 = vmul.f32 %v963, 1.442695
      %v971 = vpow.pop %v970
      %v972 = vadd.f32 %v965, 1.0
      %v973 = vadd.f32 %v967, 1.0
      %v974 = vadd.f32 %v969, 1.0
      %v975 = vadd.f32 %v971, 1.0
      %v976 = vrcp.pop %v972
      %v977 = vmul.f32 1.0, %v976
      %v978 = vrcp.pop %v973
      %v979 = vmul.f32 1.0, %v978
      %v980 = vrcp.pop %v974
      %v981 = vmul.f32 1.0, %v980
      %v982 = vrcp.pop %v975
      %v983 = vmul.f32 1.0, %v982
      %vm984 = vcmask 31744
      %985 = vst.msk [vmem:[%s388] sm:$0xff] %vm984, %v977
      %986 = vst.msk [vmem:[%s388 + $0x8] sm:$0xff] %vm984, %v979
      %987 = vst.msk [vmem:[%s388 + $0x10] sm:$0xff] %vm984, %v981
      %988 = vst.msk [vmem:[%s388 + $0x18] sm:$0xff] %vm984, %v983
      %s989 = smul.u32 4, %s22
      %p990 = scmp.lt.s32.totalorder %s989, 7
      %s991 = scalar_select %p990, %s989, 7
      %s992 = smul.addr %s991, 8
      %s993 = scalar_lea.vmem %s11, %s992
      // Predicated region
      $region65: #{tpu_custom_call.1} parent=63 // pred_check
        %p994 = pneg %p276
      $region66: #{tpu_custom_call.1} parent=63 // pred_check_branch
        %996 = sbr.rel (%p994) target = $region68
      $region67: #{tpu_custom_call.1} parent=63 // pred_region
        %s997 = smul.u32 4, %s22
      $region68: #{tpu_custom_call.1} parent=63 // pred_fallthru
        _
    $region64: #{tpu_custom_call.1} parent=5 // pred_fallthru
      _
    %p998 = scmp.le.s32.totalorder 2, %s17
    // Predicated region
    $region69: #{tpu_custom_call.1} parent=5 // pred_check
      %p999 = pneg %p998
    $region70: #{tpu_custom_call.1} parent=5 // pred_check_branch
      %1001 = sbr.rel (%p999) target = $region72
    $region71: #{tpu_custom_call.1} parent=5 // pred_region
      %s1002 = ssub.s32 %s17, 2
      // Predicated region
      $region73: #{tpu_custom_call.1} parent=71 // pred_check
        %p1003 = pneg %p282
      $region74: #{tpu_custom_call.1} parent=71 // pred_check_branch
        %1005 = sbr.rel (%p1003) target = $region76
      $region75: #{tpu_custom_call.1} parent=71 // pred_region
        %s1006 = smul.u32 4, %s23
        %p1007 = scmp.lt.s32.totalorder %s1006, 7
        %s1008 = scalar_select %p1007, %s1006, 7
        %s1009 = smul.addr %s1008, 8
        %s1010 = scalar_lea.vmem %s11, %s1009
      $region76: #{tpu_custom_call.1} parent=71 // pred_fallthru
        _
    $region72: #{tpu_custom_call.1} parent=5 // pred_fallthru
      _
  $region6: #{tpu_custom_call.1} parent=0 // loop_footer
    %s21 = sadd.s32 1, %s17
  $region7: #{tpu_custom_call.1} parent=0 // loop_footer_branch
    %16 = sbr.rel target = $region3
  $region8: #{tpu_custom_call.1} parent=0 // loop_exit
    _

</llo_original>
